<compile_context>
chip_gen: v7x
topology: tpu7x:2x2x1
jax: 0.10.0
libtpu: 0.0.40
codegen_flags: <defaults>
</compile_context>

<pallas_src>
import jax
import jax.numpy as jnp
from jax.experimental import pallas as pl
from jax.experimental.pallas import tpu as pltpu


def _tgcn_sage_kernel(x_ref, adjb_ref, w_agg_ref, w_root_ref, b_ref, p_ref, out_ref):
    # x_ref     : (T*N, F_in)   node features, all periods stacked (period-major)
    # adjb_ref  : (T*N, T*N)    kron(I_T, row-normalized adj) -> per-period mean agg
    # w_agg_ref : (F_in, W)     folded neighbor weights, packed [z*0.5 | h~] lanes
    # w_root_ref: (F_in, W)     folded root     weights, packed [z*0.5 | h~] lanes
    # b_ref     : (1,    W)     folded biases,           packed [z*0.5 | h~] lanes
    # p_ref     : (N,   T*N)    kron(probs, I_N) -> attention-weighted period sum
    # out_ref   : (N,    W)     padded output; real values live in [:, :F_out]
    x = x_ref[...]                                                       # (T*N, F_in)

    # (1) Reassociated aggregation: (adj_big @ x) @ W, not adj_big @ (x @ W).
    agg = jnp.dot(adjb_ref[...], x, preferred_element_type=jnp.float32)  # (T*N, F_in)

    # (2) Single fused pre-activation (one live (T*N, W) value; two tiny K=F_in dots).
    pre = (jnp.dot(agg, w_agg_ref[...], preferred_element_type=jnp.float32)
           + jnp.dot(x, w_root_ref[...], preferred_element_type=jnp.float32)
           + b_ref[...])                                                 # (T*N, W)

    # (3) Both gates from ONE tanh pass (z pre-act already scaled by 0.5 in weights):
    #     sigmoid(a) = 0.5*(1 + tanh(0.5*a))  =>  H_new = 0.5*(1 - t_z) * tanh(pre_h)
    half = pre.shape[-1] // 2
    t = jnp.tanh(pre)                                                    # EUP, 1 pass
    t_h = pltpu.roll(t, shift=half, axis=1)                              # XLU lane rotate
    # lanes [0:F_out): exact result; [F_out:half): exact zeros; [half:W): garbage
    # (in [-1,1]) that the caller slices off.
    h_new = 0.5 * (1.0 - t) * t_h                                        # (T*N, W)

    # (4) attention-weighted sum over periods as one lane-dense MXU matmul.
    out_ref[...] = jnp.dot(p_ref[...], h_new, preferred_element_type=jnp.float32)


def _mean_adjacency(edge_index, num_nodes):
    """Dense row-normalized adjacency: A[i, j] = 1/deg_in(i) if edge j->i."""
    src = edge_index[0]
    dst = edge_index[1]
    a = jnp.zeros((num_nodes, num_nodes), jnp.float32).at[dst, src].add(1.0)
    deg = a.sum(axis=1, keepdims=True)
    # zero-in-degree nodes aggregate to 0 (matches PyG mean-agg for isolated nodes)
    return a / jnp.maximum(deg, 1.0)


def make_graphsage_forward(params, edge_index, num_nodes, periods):
    """One-time prep (weight folding, packing, kron operands). Returns a jitted
    callable X -> (N, F_out) that only does X-dependent work per call."""
    f_in = params["wn"].shape[1]
    f_out = params["wl1"].shape[-1]
    width = ((2 * f_out + 127) // 128) * 128     # lane-dense packed gate width (>=128)
    half = width // 2                            # >= f_out by construction

    probs = jax.nn.softmax(params["attention"]).astype(jnp.float32)      # (T,)
    adj = _mean_adjacency(edge_index, num_nodes)                         # (N, N)

    # ---- algebraic folding (H = None => hidden state is exactly 0) ----
    def fold(g, scale):
        wn = scale * (params["wn"][g] @ params["wl1"][g])                # (F_in, F_out)
        wr = scale * (params["wr"][g] @ params["wl1"][g])                # (F_in, F_out)
        b = scale * (params["bc"][g] @ params["wl1"][g] + params["bl"][g])
        return wn, wr, b

    # z-gate pre-activation is pre-scaled by 0.5 so the kernel can use
    # sigmoid(a) = 0.5*(1 + tanh(0.5*a)) with a single tanh over the packed tile.
    wn_z, wr_z, b_z = fold(0, 0.5)   # update gate z (pre-scaled)
    wn_h, wr_h, b_h = fold(2, 1.0)   # candidate h~  (r-gate, index 1, is dead)

    def pack(a_z, a_h):              # z in lanes [0:f_out), h~ in [half:half+f_out)
        out = jnp.zeros((a_z.shape[0], width), jnp.float32)
        out = out.at[:, :f_out].set(a_z.astype(jnp.float32))
        out = out.at[:, half:half + f_out].set(a_h.astype(jnp.float32))
        return out

    w_agg = pack(wn_z, wn_h)                                             # (F_in, W)
    w_root = pack(wr_z, wr_h)                                            # (F_in, W)
    b_cat = pack(b_z, b_h)                                               # (1,    W)

    # Batched-period operands:
    #   adj_big (T*N, T*N) = kron(I_T, adj)   -> per-period mean aggregation
    #   p_mat   (N,   T*N) = kron(probs, I_N) -> attention-weighted period sum
    adj_big = jnp.kron(jnp.eye(periods, dtype=jnp.float32), adj)
    p_mat = jnp.kron(probs.reshape(1, periods), jnp.eye(num_nodes, dtype=jnp.float32))

    vmem = pl.BlockSpec(memory_space=pltpu.MemorySpace.VMEM)
    call = pl.pallas_call(
        _tgcn_sage_kernel,
        out_shape=jax.ShapeDtypeStruct((num_nodes, width), jnp.float32),
        in_specs=[vmem] * 6,
        out_specs=vmem,
    )

    def forward(X):
        # Only X-dependent work on the hot path; constants are baked in by jit.
        x_flat = (jnp.transpose(X, (2, 0, 1))
                  .reshape(periods * num_nodes, f_in)
                  .astype(jnp.float32))
        out_pad = call(x_flat, adj_big, w_agg, w_root, b_cat, p_mat)
        return out_pad[:, :f_out]

    return jax.jit(forward)


def graphsage_reference(X, edge_index, params):
    """Pure-JAX reference with the ORIGINAL (unfolded) math, for sanity checking."""
    n, f_in, periods = X.shape
    f_out = params["wl1"].shape[-1]
    probs = jax.nn.softmax(params["attention"])
    adj = _mean_adjacency(edge_index, n)
    h0 = jnp.zeros((n, f_out), jnp.float32)
    acc = jnp.zeros((n, f_out), jnp.float32)
    for p in range(periods):
        x = X[:, :, p]
        agg = adj @ x

        def sage(i):
            return agg @ params["wn"][i] + x @ params["wr"][i] + params["bc"][i]

        def lin(i, c, h):
            return c @ params["wl1"][i] + h @ params["wl2"][i] + params["bl"][i]

        z = jax.nn.sigmoid(lin(0, sage(0), h0))
        r = jax.nn.sigmoid(lin(1, sage(1), h0))
        h_t = jnp.tanh(lin(2, sage(2), h0 * r))
        h_new = z * h0 + (1.0 - z) * h_t
        acc = acc + probs[p] * h_new
    return acc


def init_params(key, in_channels, out_channels, periods):
    ks = jax.random.split(key, 7)
    return {
        # nn.init.uniform_ on the attention parameter
        "attention": jax.random.uniform(ks[0], (periods,), jnp.float32),
        # stacked (z, r, h) SAGEConv weights
        "wn": 0.1 * jax.random.normal(ks[1], (3, in_channels, out_channels), jnp.float32),
        "wr": 0.1 * jax.random.normal(ks[2], (3, in_channels, out_channels), jnp.float32),
        "bc": 0.1 * jax.random.normal(ks[3], (3, 1, out_channels), jnp.float32),
        # stacked (z, r, h) Linear(2*F_out -> F_out), split into [conv | hidden] halves
        "wl1": 0.1 * jax.random.normal(ks[4], (3, out_channels, out_channels), jnp.float32),
        "wl2": 0.1 * jax.random.normal(ks[5], (3, out_channels, out_channels), jnp.float32),
        "bl": 0.1 * jax.random.normal(ks[6], (3, 1, out_channels), jnp.float32),
        # NOTE: _weight_att1/_weight_att2/_bias_att1/_bias_att2 and self.conv (GCNConv)
        # are defined in __init__ but never used in forward -> intentionally omitted.
    }


if __name__ == "__main__":
    num_nodes, in_channels, out_channels, periods = 16, 4, 32, 8

    key = jax.random.PRNGKey(0)
    k_x, k_p = jax.random.split(key)

    X = jax.random.normal(k_x, (num_nodes, in_channels, periods), jnp.float32)

    # deterministic small graph: ring edges (both directions) + a few chords
    src = list(range(num_nodes)) + list(range(num_nodes)) + [0, 3, 7, 11]
    dst = ([(i + 1) % num_nodes for i in range(num_nodes)]
           + [(i - 1) % num_nodes for i in range(num_nodes)]
           + [8, 12, 2, 5])
    edge_index = jnp.array([src, dst], dtype=jnp.int32)

    params = init_params(k_p, in_channels, out_channels, periods)

    # one-time prep (hoisted off the per-call path), then the jitted forward
    forward = make_graphsage_forward(params, edge_index, num_nodes, periods)
    out = jax.block_until_ready(forward(X))

    ref = graphsage_reference(X, edge_index, params)
    assert out.shape == (num_nodes, out_channels)
    assert jnp.allclose(out, ref, rtol=1e-2, atol=1e-2), "kernel/reference mismatch"

    print("KERNEL_OK")
</pallas_src>

<mosaic_0001>
module attributes {stable_mosaic.version = 11 : i64} {
  func.func @_tgcn_sage_kernel(%arg0: memref<128x4xf32, #tpu.memory_space<vmem>>, %arg1: memref<128x128xf32, #tpu.memory_space<vmem>>, %arg2: memref<4x128xf32, #tpu.memory_space<vmem>>, %arg3: memref<4x128xf32, #tpu.memory_space<vmem>>, %arg4: memref<1x128xf32, #tpu.memory_space<vmem>>, %arg5: memref<16x128xf32, #tpu.memory_space<vmem>>, %arg6: memref<16x128xf32, #tpu.memory_space<vmem>>) attributes {dimension_semantics = [], scalar_prefetch = 0 : i64, scratch_operands = 0 : i64, tpu.core_type = #tpu.core_type<tc>} {
    %c0 = arith.constant 0 : index
    %c0_0 = arith.constant 0 : index
    %0 = vector.load %arg0[%c0, %c0_0] : memref<128x4xf32, #tpu.memory_space<vmem>>, vector<128x4xf32>
    %c0_1 = arith.constant 0 : index
    %c0_2 = arith.constant 0 : index
    %1 = vector.load %arg1[%c0_1, %c0_2] : memref<128x128xf32, #tpu.memory_space<vmem>>, vector<128x128xf32>
    %cst = arith.constant dense<0.000000e+00> : vector<128x4xf32>
    %2 = tpu.matmul %1, %0, %cst {dimension_numbers = #tpu.dot_dimension_numbers<[1], [0], [0], [1], [0, 0, 1, 1], [], []>} : vector<128x128xf32>, vector<128x4xf32>, vector<128x4xf32> -> vector<128x4xf32>
    %c0_3 = arith.constant 0 : index
    %c0_4 = arith.constant 0 : index
    %3 = vector.load %arg2[%c0_3, %c0_4] : memref<4x128xf32, #tpu.memory_space<vmem>>, vector<4x128xf32>
    %cst_5 = arith.constant dense<0.000000e+00> : vector<128x128xf32>
    %4 = tpu.matmul %2, %3, %cst_5 {dimension_numbers = #tpu.dot_dimension_numbers<[1], [0], [0], [1], [0, 0, 1, 1], [], []>} : vector<128x4xf32>, vector<4x128xf32>, vector<128x128xf32> -> vector<128x128xf32>
    %c0_6 = arith.constant 0 : index
    %c0_7 = arith.constant 0 : index
    %5 = vector.load %arg3[%c0_6, %c0_7] : memref<4x128xf32, #tpu.memory_space<vmem>>, vector<4x128xf32>
    %cst_8 = arith.constant dense<0.000000e+00> : vector<128x128xf32>
    %6 = tpu.matmul %0, %5, %cst_8 {dimension_numbers = #tpu.dot_dimension_numbers<[1], [0], [0], [1], [0, 0, 1, 1], [], []>} : vector<128x4xf32>, vector<4x128xf32>, vector<128x128xf32> -> vector<128x128xf32>
    %7 = arith.addf %4, %6 : vector<128x128xf32>
    %c0_9 = arith.constant 0 : index
    %c0_10 = arith.constant 0 : index
    %8 = vector.load %arg4[%c0_9, %c0_10] : memref<1x128xf32, #tpu.memory_space<vmem>>, vector<1x128xf32>
    %9 = vector.broadcast %8 : vector<1x128xf32> to vector<128x128xf32>
    %10 = arith.addf %7, %9 : vector<128x128xf32>
    %11 = math.tanh %10 : vector<128x128xf32>
    %c64_i32 = arith.constant 64 : i32
    %12 = tpu.dynamic_rotate %11 by %c64_i32 dim 1 : vector<128x128xf32>, i32 -> vector<128x128xf32>
    %cst_11 = arith.constant 1.000000e+00 : f32
    %13 = vector.broadcast %cst_11 : f32 to vector<128x128xf32>
    %14 = arith.subf %13, %11 : vector<128x128xf32>
    %cst_12 = arith.constant 5.000000e-01 : f32
    %15 = vector.broadcast %cst_12 : f32 to vector<128x128xf32>
    %16 = arith.mulf %15, %14 : vector<128x128xf32>
    %17 = arith.mulf %16, %12 : vector<128x128xf32>
    %c0_13 = arith.constant 0 : index
    %c0_14 = arith.constant 0 : index
    %18 = vector.load %arg5[%c0_13, %c0_14] : memref<16x128xf32, #tpu.memory_space<vmem>>, vector<16x128xf32>
    %cst_15 = arith.constant dense<0.000000e+00> : vector<16x128xf32>
    %19 = tpu.matmul %18, %17, %cst_15 {dimension_numbers = #tpu.dot_dimension_numbers<[1], [0], [0], [1], [0, 0, 1, 1], [], []>} : vector<16x128xf32>, vector<128x128xf32>, vector<16x128xf32> -> vector<16x128xf32>
    %c0_16 = arith.constant 0 : index
    %c0_17 = arith.constant 0 : index
    %20 = vector.load %arg6[%c0_16, %c0_17] : memref<16x128xf32, #tpu.memory_space<vmem>>, vector<16x128xf32>
    tpu.vector_store %arg6[%c0_16, %c0_17], %19 {strides = array<i32>} : memref<16x128xf32, #tpu.memory_space<vmem>>, vector<16x128xf32>,
    return
  }
}

</mosaic_0001>

<llo_original>
// kernel: forward.1
$region0: #{forward.1}
  #allocation0 [shape = 'u32[]', space=smem, size = 0x4, offset = 0x4, fixed_abs, tag = 'smem constant byte address 0x4 - core index']
  #allocation1 [shape = 'u32[144,128]{1,0:T(1,128)}', space=vmem, size = 0x12000, scoped, tag = 'internal scratch']
  %s0 = inlined_call_operand.vmem [shape: f32[128,4], index: 0, kind: input, shape index: {}]
  %s1 = inlined_call_operand.vmem [shape: f32[128,128], index: 1, kind: input, shape index: {}]
  %s2 = inlined_call_operand.vmem [shape: f32[4,128], index: 2, kind: input, shape index: {}]
  %s3 = inlined_call_operand.vmem [shape: f32[4,128], index: 3, kind: input, shape index: {}]
  %s4 = inlined_call_operand.vmem [shape: f32[1,128], index: 4, kind: input, shape index: {}]
  %s5 = inlined_call_operand.vmem [shape: f32[16,128], index: 5, kind: input, shape index: {}]
  %s6 = inlined_call_operand.hbm [shape: f32[16,128], index: 6, kind: output, shape index: {}]
  %s7 = sld [smem:[#allocation0]]
  $region34: #{forward.1} parent=0
    _
  %s9 = ssub.s32 1, %s7
  %s10 = scalar_select 0, %s9, %s7
  $region1: #{forward.1} parent=0
    #allocation2 [shape = 'u8[8192]{0}', space=vmem, size = 0x2000, scoped, tag = 'output window, operand 0, single buffered']
    #allocation3 [shape = 's32[1]{0}', space=sflag, size = 0x4, scoped, tag = 'scoped memory for forward.1']
    %11 = vsyncpa [#allocation3], 0
    // Predicated region
    $region2: #{forward.1} parent=1 // pred_check
      _
    $region3: #{forward.1} parent=1 // pred_check_branch
      %13 = sbr.rel (0) target = $region5
    $region4: #{forward.1} parent=1 // pred_region
      _
    $region5: #{forward.1} parent=1 // pred_fallthru
      _
    // Predicated region
    $region6: #{forward.1} parent=1 // pred_check
      _
    $region7: #{forward.1} parent=1 // pred_check_branch
      %15 = sbr.rel (0) target = $region9
    $region8: #{forward.1} parent=1 // pred_region
      _
    $region9: #{forward.1} parent=1 // pred_fallthru
      _
    // Predicated region
    $region10: #{forward.1} parent=1 // pred_check
      _
    $region11: #{forward.1} parent=1 // pred_check_branch
      %17 = sbr.rel (0) target = $region13
    $region12: #{forward.1} parent=1 // pred_region
      _
    $region13: #{forward.1} parent=1 // pred_fallthru
      _
    // Predicated region
    $region14: #{forward.1} parent=1 // pred_check
      _
    $region15: #{forward.1} parent=1 // pred_check_branch
      %19 = sbr.rel (0) target = $region17
    $region16: #{forward.1} parent=1 // pred_region
      _
    $region17: #{forward.1} parent=1 // pred_fallthru
      _
    // Predicated region
    $region18: #{forward.1} parent=1 // pred_check
      _
    $region19: #{forward.1} parent=1 // pred_check_branch
      %21 = sbr.rel (0) target = $region21
    $region20: #{forward.1} parent=1 // pred_region
      _
    $region21: #{forward.1} parent=1 // pred_fallthru
      _
    // Predicated region
    $region22: #{forward.1} parent=1 // pred_check
      _
    $region23: #{forward.1} parent=1 // pred_check_branch
      %23 = sbr.rel (0) target = $region25
    $region24: #{forward.1} parent=1 // pred_region
      _
    $region25: #{forward.1} parent=1 // pred_fallthru
      _
    %v24 = vld [vmem:[%s0] sm:$0xff]
    %v25 = vld [vmem:[%s0 + $0x8] sm:$0xff]
    %v26 = vld [vmem:[%s0 + $0x10] sm:$0xff]
    %v27 = vld [vmem:[%s0 + $0x18] sm:$0xff]
    %v28 = vld [vmem:[%s0 + $0x20] sm:$0xff]
    %v29 = vld [vmem:[%s0 + $0x28] sm:$0xff]
    %v30 = vld [vmem:[%s0 + $0x30] sm:$0xff]
    %v31 = vld [vmem:[%s0 + $0x38] sm:$0xff]
    %v32 = vld [vmem:[%s0 + $0x40] sm:$0xff]
    %v33 = vld [vmem:[%s0 + $0x48] sm:$0xff]
    %v34 = vld [vmem:[%s0 + $0x50] sm:$0xff]
    %v35 = vld [vmem:[%s0 + $0x58] sm:$0xff]
    %v36 = vld [vmem:[%s0 + $0x60] sm:$0xff]
    %v37 = vld [vmem:[%s0 + $0x68] sm:$0xff]
    %v38 = vld [vmem:[%s0 + $0x70] sm:$0xff]
    %v39 = vld [vmem:[%s0 + $0x78] sm:$0xff]
    %v40 = vld [vmem:[%s1] sm:$0xff]
    %v41 = vld [vmem:[%s1 + $0x8] sm:$0xff]
    %v42 = vld [vmem:[%s1 + $0x10] sm:$0xff]
    %v43 = vld [vmem:[%s1 + $0x18] sm:$0xff]
    %v44 = vld [vmem:[%s1 + $0x20] sm:$0xff]
    %v45 = vld [vmem:[%s1 + $0x28] sm:$0xff]
    %v46 = vld [vmem:[%s1 + $0x30] sm:$0xff]
    %v47 = vld [vmem:[%s1 + $0x38] sm:$0xff]
    %v48 = vld [vmem:[%s1 + $0x40] sm:$0xff]
    %v49 = vld [vmem:[%s1 + $0x48] sm:$0xff]
    %v50 = vld [vmem:[%s1 + $0x50] sm:$0xff]
    %v51 = vld [vmem:[%s1 + $0x58] sm:$0xff]
    %v52 = vld [vmem:[%s1 + $0x60] sm:$0xff]
    %v53 = vld [vmem:[%s1 + $0x68] sm:$0xff]
    %v54 = vld [vmem:[%s1 + $0x70] sm:$0xff]
    %v55 = vld [vmem:[%s1 + $0x78] sm:$0xff]
    %56 = vmatprep.subr.mxu0 0.0
    %57 = vmatpush1.msra.mxu0 %v24
    %58 = vmatprep.subr.mxu0 0.0
    %59 = vmatpush1.msra.mxu0 %v25
    %60 = vmatprep.subr.mxu0 0.0
    %61 = vmatpush1.msra.mxu0 %v26
    %62 = vmatprep.subr.mxu0 0.0
    %63 = vmatpush1.msra.mxu0 %v27
    %64 = vmatprep.subr.mxu0 0.0
    %65 = vmatpush1.msra.mxu0 %v28
    %66 = vmatprep.subr.mxu0 0.0
    %67 = vmatpush1.msra.mxu0 %v29
    %68 = vmatprep.subr.mxu0 0.0
    %69 = vmatpush1.msra.mxu0 %v30
    %70 = vmatprep.subr.mxu0 0.0
    %71 = vmatpush1.msra.mxu0 %v31
    %72 = vmatprep.subr.mxu0 0.0
    %73 = vmatpush1.msra.mxu0 %v32
    %74 = vmatprep.subr.mxu0 0.0
    %75 = vmatpush1.msra.mxu0 %v33
    %76 = vmatprep.subr.mxu0 0.0
    %77 = vmatpush1.msra.mxu0 %v34
    %78 = vmatprep.subr.mxu0 0.0
    %79 = vmatpush1.msra.mxu0 %v35
    %80 = vmatprep.subr.mxu0 0.0
    %81 = vmatpush1.msra.mxu0 %v36
    %82 = vmatprep.subr.mxu0 0.0
    %83 = vmatpush1.msra.mxu0 %v37
    %84 = vmatprep.subr.mxu0 0.0
    %85 = vmatpush1.msra.mxu0 %v38
    %86 = vmatprep.subr.mxu0 0.0
    %87 = vmatpush1.msra.mxu0 %v39
    %88 = vmatprep.subr.mxu0 0.0
    %89 = vmatpush1.msra.mxu0 0.0
    %90 = vmatprep.subr.mxu0 0.0
    %91 = vmatpush1.msra.mxu0 0.0
    %92 = vmatprep.subr.mxu0 0.0
    %93 = vmatpush1.msra.mxu0 0.0
    %94 = vmatprep.subr.mxu0 0.0
    %95 = vmatpush1.msra.mxu0 0.0
    %96 = vmatprep.subr.mxu0 0.0
    %97 = vmatpush1.msra.mxu0 0.0
    %98 = vmatprep.subr.mxu0 0.0
    %99 = vmatpush1.msra.mxu0 0.0
    %100 = vmatprep.subr.mxu0 0.0
    %101 = vmatpush1.msra.mxu0 0.0
    %102 = vmatprep.subr.mxu0 0.0
    %103 = vmatpush1.msra.mxu0 0.0
    %104 = vmatprep.subr.mxu0 0.0
    %105 = vmatpush1.msra.mxu0 0.0
    %106 = vmatprep.subr.mxu0 0.0
    %107 = vmatpush1.msra.mxu0 0.0
    %108 = vmatprep.subr.mxu0 0.0
    %109 = vmatpush1.msra.mxu0 0.0
    %110 = vmatprep.subr.mxu0 0.0
    %111 = vmatpush1.msra.mxu0 0.0
    %112 = vmatprep.subr.mxu0 0.0
    %113 = vmatpush1.msra.mxu0 0.0
    %114 = vmatprep.subr.mxu0 0.0
    %115 = vmatpush1.msra.mxu0 0.0
    %116 = vmatprep.subr.mxu0 0.0
    %117 = vmatpush1.msra.mxu0 0.0
    %118 = vmatprep.subr.mxu0 0.0
    %119 = vmatpush1.msra.mxu0 0.0
    %120 = vmatprep.mubr.f32.mxu0 0.0
    %121 = vmatmul.mubr.f32.gmra.mrb[0].mxu0 %v40
    %v122 = vpop.f32.mrb[0].mxu0
    %v123 = vadd.f32 0.0, %v122
    %v124 = vpop.f32.mrb[0].mxu0
    %125 = vmatprep.mubr.f32.mxu0 0.0
    %126 = vmatmul.mubr.f32.gmra.mrb[0].mxu0 %v41
    %v127 = vpop.f32.mrb[0].mxu0
    %v128 = vadd.f32 0.0, %v127
    %v129 = vpop.f32.mrb[0].mxu0
    %130 = vmatprep.mubr.f32.mxu0 0.0
    %131 = vmatmul.mubr.f32.gmra.mrb[0].mxu0 %v42
    %v132 = vpop.f32.mrb[0].mxu0
    %v133 = vadd.f32 0.0, %v132
    %v134 = vpop.f32.mrb[0].mxu0
    %135 = vmatprep.mubr.f32.mxu0 0.0
    %136 = vmatmul.mubr.f32.gmra.mrb[0].mxu0 %v43
    %v137 = vpop.f32.mrb[0].mxu0
    %v138 = vadd.f32 0.0, %v137
    %v139 = vpop.f32.mrb[0].mxu0
    %140 = vmatprep.mubr.f32.mxu0 0.0
    %141 = vmatmul.mubr.f32.gmra.mrb[0].mxu0 %v44
    %v142 = vpop.f32.mrb[0].mxu0
    %v143 = vadd.f32 0.0, %v142
    %v144 = vpop.f32.mrb[0].mxu0
    %145 = vmatprep.mubr.f32.mxu0 0.0
    %146 = vmatmul.mubr.f32.gmra.mrb[0].mxu0 %v45
    %v147 = vpop.f32.mrb[0].mxu0
    %v148 = vadd.f32 0.0, %v147
    %v149 = vpop.f32.mrb[0].mxu0
    %150 = vmatprep.mubr.f32.mxu0 0.0
    %151 = vmatmul.mubr.f32.gmra.mrb[0].mxu0 %v46
    %v152 = vpop.f32.mrb[0].mxu0
    %v153 = vadd.f32 0.0, %v152
    %v154 = vpop.f32.mrb[0].mxu0
    %155 = vmatprep.mubr.f32.mxu0 0.0
    %156 = vmatmul.mubr.f32.gmra.mrb[0].mxu0 %v47
    %v157 = vpop.f32.mrb[0].mxu0
    %v158 = vadd.f32 0.0, %v157
    %v159 = vpop.f32.mrb[0].mxu0
    %160 = vmatprep.mubr.f32.mxu0 0.0
    %161 = vmatmul.mubr.f32.gmra.mrb[0].mxu0 %v48
    %v162 = vpop.f32.mrb[0].mxu0
    %v163 = vadd.f32 0.0, %v162
    %v164 = vpop.f32.mrb[0].mxu0
    %165 = vmatprep.mubr.f32.mxu0 0.0
    %166 = vmatmul.mubr.f32.gmra.mrb[0].mxu0 %v49
    %v167 = vpop.f32.mrb[0].mxu0
    %v168 = vadd.f32 0.0, %v167
    %v169 = vpop.f32.mrb[0].mxu0
    %170 = vmatprep.mubr.f32.mxu0 0.0
    %171 = vmatmul.mubr.f32.gmra.mrb[0].mxu0 %v50
    %v172 = vpop.f32.mrb[0].mxu0
    %v173 = vadd.f32 0.0, %v172
    %v174 = vpop.f32.mrb[0].mxu0
    %175 = vmatprep.mubr.f32.mxu0 0.0
    %176 = vmatmul.mubr.f32.gmra.mrb[0].mxu0 %v51
    %v177 = vpop.f32.mrb[0].mxu0
    %v178 = vadd.f32 0.0, %v177
    %v179 = vpop.f32.mrb[0].mxu0
    %180 = vmatprep.mubr.f32.mxu0 0.0
    %181 = vmatmul.mubr.f32.gmra.mrb[0].mxu0 %v52
    %v182 = vpop.f32.mrb[0].mxu0
    %v183 = vadd.f32 0.0, %v182
    %v184 = vpop.f32.mrb[0].mxu0
    %185 = vmatprep.mubr.f32.mxu0 0.0
    %186 = vmatmul.mubr.f32.gmra.mrb[0].mxu0 %v53
    %v187 = vpop.f32.mrb[0].mxu0
    %v188 = vadd.f32 0.0, %v187
    %v189 = vpop.f32.mrb[0].mxu0
    %190 = vmatprep.mubr.f32.mxu0 0.0
    %191 = vmatmul.mubr.f32.gmra.mrb[0].mxu0 %v54
    %v192 = vpop.f32.mrb[0].mxu0
    %v193 = vadd.f32 0.0, %v192
    %v194 = vpop.f32.mrb[0].mxu0
    %195 = vmatprep.mubr.f32.mxu0 0.0
    %196 = vmatmul.mubr.f32.gmra.mrb[0].mxu0 %v55
    %v197 = vpop.f32.mrb[0].mxu0
    %v198 = vadd.f32 0.0, %v197
    %v199 = vpop.f32.mrb[0].mxu0
    %200 = vdwg.mxu0
    %v201 = vld [vmem:[%s2] sm:$0xf]
    %v202 = vld [vmem:[%s3] sm:$0xf]
    %vm203 = vcmask 31744
    %v205 = vsel %vm203, %v24, 0
    %v208 = vsel %vm203, %v25, 0
    %v211 = vsel %vm203, %v26, 0
    %v214 = vsel %vm203, %v27, 0
    %v217 = vsel %vm203, %v28, 0
    %v220 = vsel %vm203, %v29, 0
    %v223 = vsel %vm203, %v30, 0
    %v226 = vsel %vm203, %v31, 0
    %v229 = vsel %vm203, %v32, 0
    %v232 = vsel %vm203, %v33, 0
    %v235 = vsel %vm203, %v34, 0
    %v238 = vsel %vm203, %v35, 0
    %v241 = vsel %vm203, %v36, 0
    %v244 = vsel %vm203, %v37, 0
    %v247 = vsel %vm203, %v38, 0
    %v250 = vsel %vm203, %v39, 0
    %vm252 = vcmask 1043456
    %v254 = vsel %vm252, %v202, 0
    %256 = vmatprep.subr.mxu0 0.0
    %257 = vmatpush1.msra.mxu0 %v254
    %258 = vmatprep.subr.mxu0 0.0
    %259 = vmatpush1.msra.mxu0 0.0
    %260 = vmatprep.subr.mxu0 0.0
    %261 = vmatpush1.msra.mxu0 0.0
    %262 = vmatprep.subr.mxu0 0.0
    %263 = vmatpush1.msra.mxu0 0.0
    %264 = vmatprep.subr.mxu0 0.0
    %265 = vmatpush1.msra.mxu0 0.0
    %266 = vmatprep.subr.mxu0 0.0
    %267 = vmatpush1.msra.mxu0 0.0
    %268 = vmatprep.subr.mxu0 0.0
    %269 = vmatpush1.msra.mxu0 0.0
    %270 = vmatprep.subr.mxu0 0.0
    %271 = vmatpush1.msra.mxu0 0.0
    %272 = vmatprep.subr.mxu0 0.0
    %273 = vmatpush1.msra.mxu0 0.0
    %274 = vmatprep.subr.mxu0 0.0
    %275 = vmatpush1.msra.mxu0 0.0
    %276 = vmatprep.subr.mxu0 0.0
    %277 = vmatpush1.msra.mxu0 0.0
    %278 = vmatprep.subr.mxu0 0.0
    %279 = vmatpush1.msra.mxu0 0.0
    %280 = vmatprep.subr.mxu0 0.0
    %281 = vmatpush1.msra.mxu0 0.0
    %282 = vmatprep.subr.mxu0 0.0
    %283 = vmatpush1.msra.mxu0 0.0
    %284 = vmatprep.subr.mxu0 0.0
    %285 = vmatpush1.msra.mxu0 0.0
    %286 = vmatprep.subr.mxu0 0.0
    %287 = vmatpush1.msra.mxu0 0.0
    %288 = vmatprep.subr.mxu0 0.0
    %289 = vmatpush1.msra.mxu0 0.0
    %290 = vmatprep.subr.mxu0 0.0
    %291 = vmatpush1.msra.mxu0 0.0
    %292 = vmatprep.subr.mxu0 0.0
    %293 = vmatpush1.msra.mxu0 0.0
    %294 = vmatprep.subr.mxu0 0.0
    %295 = vmatpush1.msra.mxu0 0.0
    %296 = vmatprep.subr.mxu0 0.0
    %297 = vmatpush1.msra.mxu0 0.0
    %298 = vmatprep.subr.mxu0 0.0
    %299 = vmatpush1.msra.mxu0 0.0
    %300 = vmatprep.subr.mxu0 0.0
    %301 = vmatpush1.msra.mxu0 0.0
    %302 = vmatprep.subr.mxu0 0.0
    %303 = vmatpush1.msra.mxu0 0.0
    %304 = vmatprep.subr.mxu0 0.0
    %305 = vmatpush1.msra.mxu0 0.0
    %306 = vmatprep.subr.mxu0 0.0
    %307 = vmatpush1.msra.mxu0 0.0
    %308 = vmatprep.subr.mxu0 0.0
    %309 = vmatpush1.msra.mxu0 0.0
    %310 = vmatprep.subr.mxu0 0.0
    %311 = vmatpush1.msra.mxu0 0.0
    %312 = vmatprep.subr.mxu0 0.0
    %313 = vmatpush1.msra.mxu0 0.0
    %314 = vmatprep.subr.mxu0 0.0
    %315 = vmatpush1.msra.mxu0 0.0
    %316 = vmatprep.subr.mxu0 0.0
    %317 = vmatpush1.msra.mxu0 0.0
    %318 = vmatprep.subr.mxu0 0.0
    %319 = vmatpush1.msra.mxu0 0.0
    %320 = vmatprep.mubr.f32.mxu0 0.0
    %321 = vmatmul.mubr.f32.gmra.mrb[0].mxu0 %v205
    %v322 = vpop.f32.mrb[0].mxu0
    %v323 = vadd.f32 0.0, %v322
    %v324 = vpop.f32.mrb[0].mxu0
    %325 = vmatprep.mubr.f32.mxu0 0.0
    %326 = vmatmul.mubr.f32.gmra.mrb[0].mxu0 %v208
    %v327 = vpop.f32.mrb[0].mxu0
    %v328 = vadd.f32 0.0, %v327
    %v329 = vpop.f32.mrb[0].mxu0
    %330 = vmatprep.mubr.f32.mxu0 0.0
    %331 = vmatmul.mubr.f32.gmra.mrb[0].mxu0 %v211
    %v332 = vpop.f32.mrb[0].mxu0
    %v333 = vadd.f32 0.0, %v332
    %v334 = vpop.f32.mrb[0].mxu0
    %335 = vmatprep.mubr.f32.mxu0 0.0
    %336 = vmatmul.mubr.f32.gmra.mrb[0].mxu0 %v214
    %v337 = vpop.f32.mrb[0].mxu0
    %v338 = vadd.f32 0.0, %v337
    %v339 = vpop.f32.mrb[0].mxu0
    %340 = vmatprep.mubr.f32.mxu0 0.0
    %341 = vmatmul.mubr.f32.gmra.mrb[0].mxu0 %v217
    %v342 = vpop.f32.mrb[0].mxu0
    %v343 = vadd.f32 0.0, %v342
    %v344 = vpop.f32.mrb[0].mxu0
    %345 = vmatprep.mubr.f32.mxu0 0.0
    %346 = vmatmul.mubr.f32.gmra.mrb[0].mxu0 %v220
    %v347 = vpop.f32.mrb[0].mxu0
    %v348 = vadd.f32 0.0, %v347
    %v349 = vpop.f32.mrb[0].mxu0
    %350 = vmatprep.mubr.f32.mxu0 0.0
    %351 = vmatmul.mubr.f32.gmra.mrb[0].mxu0 %v223
    %v352 = vpop.f32.mrb[0].mxu0
    %v353 = vadd.f32 0.0, %v352
    %v354 = vpop.f32.mrb[0].mxu0
    %355 = vmatprep.mubr.f32.mxu0 0.0
    %356 = vmatmul.mubr.f32.gmra.mrb[0].mxu0 %v226
    %v357 = vpop.f32.mrb[0].mxu0
    %v358 = vadd.f32 0.0, %v357
    %v359 = vpop.f32.mrb[0].mxu0
    %360 = vmatprep.mubr.f32.mxu0 0.0
    %361 = vmatmul.mubr.f32.gmra.mrb[0].mxu0 %v229
    %v362 = vpop.f32.mrb[0].mxu0
    %v363 = vadd.f32 0.0, %v362
    %v364 = vpop.f32.mrb[0].mxu0
    %365 = vmatprep.mubr.f32.mxu0 0.0
    %366 = vmatmul.mubr.f32.gmra.mrb[0].mxu0 %v232
    %v367 = vpop.f32.mrb[0].mxu0
    %v368 = vadd.f32 0.0, %v367
    %v369 = vpop.f32.mrb[0].mxu0
    %370 = vmatprep.mubr.f32.mxu0 0.0
    %371 = vmatmul.mubr.f32.gmra.mrb[0].mxu0 %v235
    %v372 = vpop.f32.mrb[0].mxu0
    %v373 = vadd.f32 0.0, %v372
    %v374 = vpop.f32.mrb[0].mxu0
    %375 = vmatprep.mubr.f32.mxu0 0.0
    %376 = vmatmul.mubr.f32.gmra.mrb[0].mxu0 %v238
    %v377 = vpop.f32.mrb[0].mxu0
    %v378 = vadd.f32 0.0, %v377
    %v379 = vpop.f32.mrb[0].mxu0
    %380 = vmatprep.mubr.f32.mxu0 0.0
    %381 = vmatmul.mubr.f32.gmra.mrb[0].mxu0 %v241
    %v382 = vpop.f32.mrb[0].mxu0
    %v383 = vadd.f32 0.0, %v382
    %v384 = vpop.f32.mrb[0].mxu0
    %385 = vmatprep.mubr.f32.mxu0 0.0
    %386 = vmatmul.mubr.f32.gmra.mrb[0].mxu0 %v244
    %v387 = vpop.f32.mrb[0].mxu0
    %v388 = vadd.f32 0.0, %v387
    %v389 = vpop.f32.mrb[0].mxu0
    %390 = vmatprep.mubr.f32.mxu0 0.0
    %391 = vmatmul.mubr.f32.gmra.mrb[0].mxu0 %v247
    %v392 = vpop.f32.mrb[0].mxu0
    %v393 = vadd.f32 0.0, %v392
    %v394 = vpop.f32.mrb[0].mxu0
    %395 = vmatprep.mubr.f32.mxu0 0.0
    %396 = vmatmul.mubr.f32.gmra.mrb[0].mxu0 %v250
    %v397 = vpop.f32.mrb[0].mxu0
    %v398 = vadd.f32 0.0, %v397
    %v399 = vpop.f32.mrb[0].mxu0
    %400 = vdwg.mxu0
    %v402 = vsel %vm203, %v123, 0
    %v405 = vsel %vm203, %v128, 0
    %v408 = vsel %vm203, %v133, 0
    %v411 = vsel %vm203, %v138, 0
    %v414 = vsel %vm203, %v143, 0
    %v417 = vsel %vm203, %v148, 0
    %v420 = vsel %vm203, %v153, 0
    %v423 = vsel %vm203, %v158, 0
    %v426 = vsel %vm203, %v163, 0
    %v429 = vsel %vm203, %v168, 0
    %v432 = vsel %vm203, %v173, 0
    %v435 = vsel %vm203, %v178, 0
    %v438 = vsel %vm203, %v183, 0
    %v441 = vsel %vm203, %v188, 0
    %v444 = vsel %vm203, %v193, 0
    %v447 = vsel %vm203, %v198, 0
    %v450 = vsel %vm252, %v201, 0
    %452 = vmatprep.subr.mxu0 0.0
    %453 = vmatpush1.msra.mxu0 %v450
    %454 = vmatprep.subr.mxu0 0.0
    %455 = vmatpush1.msra.mxu0 0.0
    %456 = vmatprep.subr.mxu0 0.0
    %457 = vmatpush1.msra.mxu0 0.0
    %458 = vmatprep.subr.mxu0 0.0
    %459 = vmatpush1.msra.mxu0 0.0
    %460 = vmatprep.subr.mxu0 0.0
    %461 = vmatpush1.msra.mxu0 0.0
    %462 = vmatprep.subr.mxu0 0.0
    %463 = vmatpush1.msra.mxu0 0.0
    %464 = vmatprep.subr.mxu0 0.0
    %465 = vmatpush1.msra.mxu0 0.0
    %466 = vmatprep.subr.mxu0 0.0
    %467 = vmatpush1.msra.mxu0 0.0
    %468 = vmatprep.subr.mxu0 0.0
    %469 = vmatpush1.msra.mxu0 0.0
    %470 = vmatprep.subr.mxu0 0.0
    %471 = vmatpush1.msra.mxu0 0.0
    %472 = vmatprep.subr.mxu0 0.0
    %473 = vmatpush1.msra.mxu0 0.0
    %474 = vmatprep.subr.mxu0 0.0
    %475 = vmatpush1.msra.mxu0 0.0
    %476 = vmatprep.subr.mxu0 0.0
    %477 = vmatpush1.msra.mxu0 0.0
    %478 = vmatprep.subr.mxu0 0.0
    %479 = vmatpush1.msra.mxu0 0.0
    %480 = vmatprep.subr.mxu0 0.0
    %481 = vmatpush1.msra.mxu0 0.0
    %482 = vmatprep.subr.mxu0 0.0
    %483 = vmatpush1.msra.mxu0 0.0
    %484 = vmatprep.subr.mxu0 0.0
    %485 = vmatpush1.msra.mxu0 0.0
    %486 = vmatprep.subr.mxu0 0.0
    %487 = vmatpush1.msra.mxu0 0.0
    %488 = vmatprep.subr.mxu0 0.0
    %489 = vmatpush1.msra.mxu0 0.0
    %490 = vmatprep.subr.mxu0 0.0
    %491 = vmatpush1.msra.mxu0 0.0
    %492 = vmatprep.subr.mxu0 0.0
    %493 = vmatpush1.msra.mxu0 0.0
    %494 = vmatprep.subr.mxu0 0.0
    %495 = vmatpush1.msra.mxu0 0.0
    %496 = vmatprep.subr.mxu0 0.0
    %497 = vmatpush1.msra.mxu0 0.0
    %498 = vmatprep.subr.mxu0 0.0
    %499 = vmatpush1.msra.mxu0 0.0
    %500 = vmatprep.subr.mxu0 0.0
    %501 = vmatpush1.msra.mxu0 0.0
    %502 = vmatprep.subr.mxu0 0.0
    %503 = vmatpush1.msra.mxu0 0.0
    %504 = vmatprep.subr.mxu0 0.0
    %505 = vmatpush1.msra.mxu0 0.0
    %506 = vmatprep.subr.mxu0 0.0
    %507 = vmatpush1.msra.mxu0 0.0
    %508 = vmatprep.subr.mxu0 0.0
    %509 = vmatpush1.msra.mxu0 0.0
    %510 = vmatprep.subr.mxu0 0.0
    %511 = vmatpush1.msra.mxu0 0.0
    %512 = vmatprep.subr.mxu0 0.0
    %513 = vmatpush1.msra.mxu0 0.0
    %514 = vmatprep.subr.mxu0 0.0
    %515 = vmatpush1.msra.mxu0 0.0
    %516 = vmatprep.mubr.f32.mxu0 0.0
    %517 = vmatmul.mubr.f32.gmra.mrb[0].mxu0 %v402
    %v518 = vpop.f32.mrb[0].mxu0
    %v519 = vadd.f32 %v323, %v518
    %v520 = vpop.f32.mrb[0].mxu0
    %521 = vmatprep.mubr.f32.mxu0 0.0
    %522 = vmatmul.mubr.f32.gmra.mrb[0].mxu0 %v405
    %v523 = vpop.f32.mrb[0].mxu0
    %v524 = vadd.f32 %v328, %v523
    %v525 = vpop.f32.mrb[0].mxu0
    %526 = vmatprep.mubr.f32.mxu0 0.0
    %527 = vmatmul.mubr.f32.gmra.mrb[0].mxu0 %v408
    %v528 = vpop.f32.mrb[0].mxu0
    %v529 = vadd.f32 %v333, %v528
    %v530 = vpop.f32.mrb[0].mxu0
    %531 = vmatprep.mubr.f32.mxu0 0.0
    %532 = vmatmul.mubr.f32.gmra.mrb[0].mxu0 %v411
    %v533 = vpop.f32.mrb[0].mxu0
    %v534 = vadd.f32 %v338, %v533
    %v535 = vpop.f32.mrb[0].mxu0
    %536 = vmatprep.mubr.f32.mxu0 0.0
    %537 = vmatmul.mubr.f32.gmra.mrb[0].mxu0 %v414
    %v538 = vpop.f32.mrb[0].mxu0
    %v539 = vadd.f32 %v343, %v538
    %v540 = vpop.f32.mrb[0].mxu0
    %541 = vmatprep.mubr.f32.mxu0 0.0
    %542 = vmatmul.mubr.f32.gmra.mrb[0].mxu0 %v417
    %v543 = vpop.f32.mrb[0].mxu0
    %v544 = vadd.f32 %v348, %v543
    %v545 = vpop.f32.mrb[0].mxu0
    %546 = vmatprep.mubr.f32.mxu0 0.0
    %547 = vmatmul.mubr.f32.gmra.mrb[0].mxu0 %v420
    %v548 = vpop.f32.mrb[0].mxu0
    %v549 = vadd.f32 %v353, %v548
    %v550 = vpop.f32.mrb[0].mxu0
    %551 = vmatprep.mubr.f32.mxu0 0.0
    %552 = vmatmul.mubr.f32.gmra.mrb[0].mxu0 %v423
    %v553 = vpop.f32.mrb[0].mxu0
    %v554 = vadd.f32 %v358, %v553
    %v555 = vpop.f32.mrb[0].mxu0
    %556 = vmatprep.mubr.f32.mxu0 0.0
    %557 = vmatmul.mubr.f32.gmra.mrb[0].mxu0 %v426
    %v558 = vpop.f32.mrb[0].mxu0
    %v559 = vadd.f32 %v363, %v558
    %v560 = vpop.f32.mrb[0].mxu0
    %561 = vmatprep.mubr.f32.mxu0 0.0
    %562 = vmatmul.mubr.f32.gmra.mrb[0].mxu0 %v429
    %v563 = vpop.f32.mrb[0].mxu0
    %v564 = vadd.f32 %v368, %v563
    %v565 = vpop.f32.mrb[0].mxu0
    %566 = vmatprep.mubr.f32.mxu0 0.0
    %567 = vmatmul.mubr.f32.gmra.mrb[0].mxu0 %v432
    %v568 = vpop.f32.mrb[0].mxu0
    %v569 = vadd.f32 %v373, %v568
    %v570 = vpop.f32.mrb[0].mxu0
    %571 = vmatprep.mubr.f32.mxu0 0.0
    %572 = vmatmul.mubr.f32.gmra.mrb[0].mxu0 %v435
    %v573 = vpop.f32.mrb[0].mxu0
    %v574 = vadd.f32 %v378, %v573
    %v575 = vpop.f32.mrb[0].mxu0
    %576 = vmatprep.mubr.f32.mxu0 0.0
    %577 = vmatmul.mubr.f32.gmra.mrb[0].mxu0 %v438
    %v578 = vpop.f32.mrb[0].mxu0
    %v579 = vadd.f32 %v383, %v578
    %v580 = vpop.f32.mrb[0].mxu0
    %581 = vmatprep.mubr.f32.mxu0 0.0
    %582 = vmatmul.mubr.f32.gmra.mrb[0].mxu0 %v441
    %v583 = vpop.f32.mrb[0].mxu0
    %v584 = vadd.f32 %v388, %v583
    %v585 = vpop.f32.mrb[0].mxu0
    %586 = vmatprep.mubr.f32.mxu0 0.0
    %587 = vmatmul.mubr.f32.gmra.mrb[0].mxu0 %v444
    %v588 = vpop.f32.mrb[0].mxu0
    %v589 = vadd.f32 %v393, %v588
    %v590 = vpop.f32.mrb[0].mxu0
    %591 = vmatprep.mubr.f32.mxu0 0.0
    %592 = vmatmul.mubr.f32.gmra.mrb[0].mxu0 %v447
    %v593 = vpop.f32.mrb[0].mxu0
    %v594 = vadd.f32 %v398, %v593
    %v595 = vpop.f32.mrb[0].mxu0
    %596 = vdwg.mxu0
    %v597 = vld [vmem:[%s4] sm:$0x1]
    %v599 = vlaneseq
    %v600 = vshrl.u32 %v599, 7
    %v601 = vsub.s32 0, %v600
    %v602 = vrot.slane %v597, %v601
    %v604 = vadd.f32 %v519, %v602
    %v605 = vadd.f32 %v524, %v602
    %v606 = vadd.f32 %v529, %v602
    %v607 = vadd.f32 %v534, %v602
    %v608 = vadd.f32 %v539, %v602
    %v609 = vadd.f32 %v544, %v602
    %v610 = vadd.f32 %v549, %v602
    %v611 = vadd.f32 %v554, %v602
    %v612 = vadd.f32 %v559, %v602
    %v613 = vadd.f32 %v564, %v602
    %v614 = vadd.f32 %v569, %v602
    %v615 = vadd.f32 %v574, %v602
    %v616 = vadd.f32 %v579, %v602
    %v617 = vadd.f32 %v584, %v602
    %v618 = vadd.f32 %v589, %v602
    %v619 = vadd.f32 %v594, %v602
    %v620 = vtanh.pop %v604
    %v621 = vtanh.pop %v605
    %v622 = vtanh.pop %v606
    %v623 = vtanh.pop %v607
    %v624 = vtanh.pop %v608
    %v625 = vtanh.pop %v609
    %v626 = vtanh.pop %v610
    %v627 = vtanh.pop %v611
    %v628 = vtanh.pop %v612
    %v629 = vtanh.pop %v613
    %v630 = vtanh.pop %v614
    %v631 = vtanh.pop %v615
    %v632 = vtanh.pop %v616
    %v633 = vtanh.pop %v617
    %v634 = vtanh.pop %v618
    %v635 = vtanh.pop %v619
    %636 = vrot.lane.b32.xlu0 %v620, 64
    %v637 = vpop.permute.xlu0 %636
    %638 = vrot.lane.b32.xlu0 %v621, 64
    %v639 = vpop.permute.xlu0 %638
    %640 = vrot.lane.b32.xlu0 %v622, 64
    %v641 = vpop.permute.xlu0 %640
    %642 = vrot.lane.b32.xlu0 %v623, 64
    %v643 = vpop.permute.xlu0 %642
    %644 = vrot.lane.b32.xlu0 %v624, 64
    %v645 = vpop.permute.xlu0 %644
    %646 = vrot.lane.b32.xlu0 %v625, 64
    %v647 = vpop.permute.xlu0 %646
    %648 = vrot.lane.b32.xlu0 %v626, 64
    %v649 = vpop.permute.xlu0 %648
    %650 = vrot.lane.b32.xlu0 %v627, 64
    %v651 = vpop.permute.xlu0 %650
    %652 = vrot.lane.b32.xlu0 %v628, 64
    %v653 = vpop.permute.xlu0 %652
    %654 = vrot.lane.b32.xlu0 %v629, 64
    %v655 = vpop.permute.xlu0 %654
    %656 = vrot.lane.b32.xlu0 %v630, 64
    %v657 = vpop.permute.xlu0 %656
    %658 = vrot.lane.b32.xlu0 %v631, 64
    %v659 = vpop.permute.xlu0 %658
    %660 = vrot.lane.b32.xlu0 %v632, 64
    %v661 = vpop.permute.xlu0 %660
    %662 = vrot.lane.b32.xlu0 %v633, 64
    %v663 = vpop.permute.xlu0 %662
    %664 = vrot.lane.b32.xlu0 %v634, 64
    %v665 = vpop.permute.xlu0 %664
    %666 = vrot.lane.b32.xlu0 %v635, 64
    %v667 = vpop.permute.xlu0 %666
    %v668 = vsub.f32 1.0, %v620
    %v669 = vsub.f32 1.0, %v621
    %v670 = vsub.f32 1.0, %v622
    %v671 = vsub.f32 1.0, %v623
    %v672 = vsub.f32 1.0, %v624
    %v673 = vsub.f32 1.0, %v625
    %v674 = vsub.f32 1.0, %v626
    %v675 = vsub.f32 1.0, %v627
    %v676 = vsub.f32 1.0, %v628
    %v677 = vsub.f32 1.0, %v629
    %v678 = vsub.f32 1.0, %v630
    %v679 = vsub.f32 1.0, %v631
    %v680 = vsub.f32 1.0, %v632
    %v681 = vsub.f32 1.0, %v633
    %v682 = vsub.f32 1.0, %v634
    %v683 = vsub.f32 1.0, %v635
    %v684 = vmul.f32 %v668, 0.5
    %v685 = vmul.f32 %v669, 0.5
    %v686 = vmul.f32 %v670, 0.5
    %v687 = vmul.f32 %v671, 0.5
    %v688 = vmul.f32 %v672, 0.5
    %v689 = vmul.f32 %v673, 0.5
    %v690 = vmul.f32 %v674, 0.5
    %v691 = vmul.f32 %v675, 0.5
    %v692 = vmul.f32 %v676, 0.5
    %v693 = vmul.f32 %v677, 0.5
    %v694 = vmul.f32 %v678, 0.5
    %v695 = vmul.f32 %v679, 0.5
    %v696 = vmul.f32 %v680, 0.5
    %v697 = vmul.f32 %v681, 0.5
    %v698 = vmul.f32 %v682, 0.5
    %v699 = vmul.f32 %v683, 0.5
    %v700 = vmul.f32 %v684, %v637
    %v701 = vmul.f32 %v685, %v639
    %v702 = vmul.f32 %v686, %v641
    %v703 = vmul.f32 %v687, %v643
    %v704 = vmul.f32 %v688, %v645
    %v705 = vmul.f32 %v689, %v647
    %v706 = vmul.f32 %v690, %v649
    %v707 = vmul.f32 %v691, %v651
    %v708 = vmul.f32 %v692, %v653
    %v709 = vmul.f32 %v693, %v655
    %v710 = vmul.f32 %v694, %v657
    %v711 = vmul.f32 %v695, %v659
    %v712 = vmul.f32 %v696, %v661
    %v713 = vmul.f32 %v697, %v663
    %v714 = vmul.f32 %v698, %v665
    %v715 = vmul.f32 %v699, %v667
    %v716 = vld [vmem:[%s5] sm:$0xff]
    %v717 = vld [vmem:[%s5 + $0x8] sm:$0xff]
    %718 = vmatprep.subr.mxu0 0.0
    %719 = vmatpush1.msra.mxu0 %v700
    %720 = vmatprep.subr.mxu0 0.0
    %721 = vmatpush1.msra.mxu0 %v701
    %722 = vmatprep.subr.mxu0 0.0
    %723 = vmatpush1.msra.mxu0 %v702
    %724 = vmatprep.subr.mxu0 0.0
    %725 = vmatpush1.msra.mxu0 %v703
    %726 = vmatprep.subr.mxu0 0.0
    %727 = vmatpush1.msra.mxu0 %v704
    %728 = vmatprep.subr.mxu0 0.0
    %729 = vmatpush1.msra.mxu0 %v705
    %730 = vmatprep.subr.mxu0 0.0
    %731 = vmatpush1.msra.mxu0 %v706
    %732 = vmatprep.subr.mxu0 0.0
    %733 = vmatpush1.msra.mxu0 %v707
    %734 = vmatprep.subr.mxu0 0.0
    %735 = vmatpush1.msra.mxu0 %v708
    %736 = vmatprep.subr.mxu0 0.0
    %737 = vmatpush1.msra.mxu0 %v709
    %738 = vmatprep.subr.mxu0 0.0
    %739 = vmatpush1.msra.mxu0 %v710
    %740 = vmatprep.subr.mxu0 0.0
    %741 = vmatpush1.msra.mxu0 %v711
    %742 = vmatprep.subr.mxu0 0.0
    %743 = vmatpush1.msra.mxu0 %v712
    %744 = vmatprep.subr.mxu0 0.0
    %745 = vmatpush1.msra.mxu0 %v713
    %746 = vmatprep.subr.mxu0 0.0
    %747 = vmatpush1.msra.mxu0 %v714
    %748 = vmatprep.subr.mxu0 0.0
    %749 = vmatpush1.msra.mxu0 %v715
    %750 = vmatprep.subr.mxu0 0.0
    %751 = vmatpush1.msra.mxu0 0.0
    %752 = vmatprep.subr.mxu0 0.0
    %753 = vmatpush1.msra.mxu0 0.0
    %754 = vmatprep.subr.mxu0 0.0
    %755 = vmatpush1.msra.mxu0 0.0
    %756 = vmatprep.subr.mxu0 0.0
    %757 = vmatpush1.msra.mxu0 0.0
    %758 = vmatprep.subr.mxu0 0.0
    %759 = vmatpush1.msra.mxu0 0.0
    %760 = vmatprep.subr.mxu0 0.0
    %761 = vmatpush1.msra.mxu0 0.0
    %762 = vmatprep.subr.mxu0 0.0
    %763 = vmatpush1.msra.mxu0 0.0
    %764 = vmatprep.subr.mxu0 0.0
    %765 = vmatpush1.msra.mxu0 0.0
    %766 = vmatprep.subr.mxu0 0.0
    %767 = vmatpush1.msra.mxu0 0.0
    %768 = vmatprep.subr.mxu0 0.0
    %769 = vmatpush1.msra.mxu0 0.0
    %770 = vmatprep.subr.mxu0 0.0
    %771 = vmatpush1.msra.mxu0 0.0
    %772 = vmatprep.subr.mxu0 0.0
    %773 = vmatpush1.msra.mxu0 0.0
    %774 = vmatprep.subr.mxu0 0.0
    %775 = vmatpush1.msra.mxu0 0.0
    %776 = vmatprep.subr.mxu0 0.0
    %777 = vmatpush1.msra.mxu0 0.0
    %778 = vmatprep.subr.mxu0 0.0
    %779 = vmatpush1.msra.mxu0 0.0
    %780 = vmatprep.subr.mxu0 0.0
    %781 = vmatpush1.msra.mxu0 0.0
    %782 = vmatprep.mubr.f32.mxu0 0.0
    %783 = vmatmul.mubr.f32.gmra.mrb[0].mxu0 %v716
    %v784 = vpop.f32.mrb[0].mxu0
    %v785 = vadd.f32 0.0, %v784
    %v786 = vpop.f32.mrb[0].mxu0
    %787 = vmatprep.mubr.f32.mxu0 0.0
    %788 = vmatmul.mubr.f32.gmra.mrb[0].mxu0 %v717
    %v789 = vpop.f32.mrb[0].mxu0
    %v790 = vadd.f32 0.0, %v789
    %v791 = vpop.f32.mrb[0].mxu0
    %792 = vdwg.mxu0
    %793 = vst [vmem:[#allocation2] sm:$0xff] %v785
    %794 = vst [vmem:[#allocation2 + $0x8] sm:$0xff] %v790
    // Predicated region
    $region26: #{forward.1} parent=1 // pred_check
      _
    $region27: #{forward.1} parent=1 // pred_check_branch
      %796 = sbr.rel (0) target = $region29
    $region28: #{forward.1} parent=1 // pred_region
      %s798 = ssub.s32 256, 256
      %799 = vsyncadd [#allocation3], %s798
      %s800 = sshll.u32 [#allocation2], 4
      %s801 = int_to_ptr.vmem [resolvable:$true] %s800
      %806 = dma.vmem_to_hbm [thread:$0]  %s801, 256, %s6, [#allocation3], 128, 128, 8
    $region29: #{forward.1} parent=1 // pred_fallthru
      _
    // Predicated region
    $region30: #{forward.1} parent=1 // pred_check
      _
    $region31: #{forward.1} parent=1 // pred_check_branch
      %808 = sbr.rel (0) target = $region33
    $region32: #{forward.1} parent=1 // pred_region
      %809 = dma.done [#allocation3], 256
    $region33: #{forward.1} parent=1 // pred_fallthru
      _
    %810 = vsyncpa [#allocation3], 1

</llo_original>
